<compile_context>
chip_gen: v7x
topology: tpu7x:2x2x1
jax: 0.10.0
libtpu: 0.0.40
codegen_flags: <defaults>
</compile_context>

<pallas_src>
import jax
import jax.numpy as jnp
from jax.experimental import pallas as pl
from jax.experimental.pallas import tpu as pltpu

DIM_H_PAD = 128     # hidden dim zero-padded to one full vreg lane width
VPU_OUT_MAX = 16    # out_shape <= this -> layer 2 on VPU/XLU instead of MXU


def _round_up(x, m):
    return ((x + m - 1) // m) * m


def _max_tile_n():
    # v4/v5e: 16 MiB default scoped VMEM -> smaller row tile; v6e/v7x: larger.
    try:
        kind = jax.devices()[0].device_kind.lower()
    except Exception:
        return 2048
    return 2048 if ("v3" in kind or "v4" in kind or "v5" in kind) else 8192


def _make_kernel(out_shape, mxu_layer2):
    def kernel(x_ref, w1_ref, b1_ref, w2_ref, b2_ref, o_ref):
        # layer 1 on the MXU: bf16 operands, f32 accumulate; bias/ReLU in f32 (VPU)
        h = jnp.dot(x_ref[...].astype(jnp.bfloat16), w1_ref[...],
                    preferred_element_type=jnp.float32)
        h = jnp.maximum(h + b1_ref[...], 0.0)
        if mxu_layer2:
            # wide output: worth full MXU output columns
            o = jnp.dot(h.astype(jnp.bfloat16), w2_ref[...],
                        preferred_element_type=jnp.float32)
        else:
            # tiny output: VPU multiply + XLU lane reduce (MXU min output tile
            # is 128 cols, which would compute 128x the needed result).
            w2 = w2_ref[...]                              # (out_shape, 128) f32
            cols = [jnp.sum(h * w2[j:j + 1, :], axis=-1, keepdims=True)
                    for j in range(out_shape)]
            o = cols[0] if out_shape == 1 else jnp.concatenate(cols, axis=-1)
        o_ref[...] = (o + b2_ref[...]).astype(o_ref.dtype)
    return kernel


def deep_class_model_forward(x, w1, b1, w2, b2):
    """Pallas forward: squeeze(relu(x @ W1 + b1) @ W2 + b2).

    x: (N, in_shape); w1: (in_shape, dim_h); b1: (dim_h,)|(1, dim_h);
    w2: (dim_h, out_shape); b2: (out_shape,)|(1, out_shape).
    Weights are stored pre-transposed relative to PyTorch nn.Linear storage.
    """
    x = x.astype(jnp.float32)
    n, in_shape = x.shape
    dim_h = w1.shape[1]
    out_shape = w2.shape[1]
    mxu_layer2 = out_shape > VPU_OUT_MAX

    b1p = jnp.reshape(b1, (1, dim_h)).astype(jnp.float32)
    b2p = jnp.reshape(b2, (1, out_shape)).astype(jnp.float32)

    # ---- layer-1 weight: zero-pad hidden to 128 lanes, bf16 for the MXU ----
    w1p = jnp.zeros((in_shape, DIM_H_PAD), jnp.float32).at[:, :dim_h].set(w1)
    w1p = w1p.astype(jnp.bfloat16)
    b1pp = jnp.zeros((1, DIM_H_PAD), jnp.float32).at[:, :dim_h].set(b1p)

    if mxu_layer2:
        w2p = jnp.zeros((DIM_H_PAD, out_shape), jnp.float32).at[:dim_h, :].set(w2)
        w2p = w2p.astype(jnp.bfloat16)
        w2_spec = pl.BlockSpec((DIM_H_PAD, out_shape), lambda i: (0, 0))
    else:
        # transposed rows (out_shape, 128) f32 for the VPU/XLU path
        w2p = jnp.zeros((out_shape, DIM_H_PAD), jnp.float32).at[:, :dim_h].set(w2.T)
        w2_spec = pl.BlockSpec((out_shape, DIM_H_PAD), lambda i: (0, 0))

    # ---- batch tiling: >=2 tiles for megacore, tail padding < one tile ----
    max_tile = _max_tile_n()
    if n <= 8:
        tile_n = _round_up(max(n, 1), 8)
    else:
        n_tiles = max(-(-n // max_tile), 2)
        tile_n = min(max_tile, _round_up(-(-n // n_tiles), 8))
    n_pad = _round_up(n, tile_n)
    xp = x if n_pad == n else jnp.pad(x, ((0, n_pad - n), (0, 0)))
    grid = (n_pad // tile_n,)

    # ---- VMEM budget: narrow x / out blocks are lane-padded to 128 in VMEM ----
    in_lane = _round_up(in_shape, 128)
    out_lane = _round_up(out_shape, 128)
    vmem_bytes = (2 * tile_n * in_lane * 4          # x, double-buffered
                  + 2 * tile_n * out_lane * 4       # out, double-buffered
                  + 3 * tile_n * DIM_H_PAD * 4      # h / casts / temporaries
                  + (4 << 20))                      # weights + headroom
    vmem_bytes = int(max(16 << 20, min(vmem_bytes, 96 << 20)))

    flops = 2 * n_pad * (in_shape * DIM_H_PAD + DIM_H_PAD * out_shape)
    bytes_accessed = (4 * n_pad * in_shape                  # x read
                      + 4 * n_pad * out_shape               # out write (no pad)
                      + 2 * in_shape * DIM_H_PAD            # w1 (bf16)
                      + 4 * DIM_H_PAD                       # b1
                      + int(w2p.size) * w2p.dtype.itemsize  # w2
                      + 4 * out_shape)                      # b2

    out = pl.pallas_call(
        _make_kernel(out_shape, mxu_layer2),
        out_shape=jax.ShapeDtypeStruct((n_pad, out_shape), jnp.float32),
        grid_spec=pltpu.PrefetchScalarGridSpec(
            num_scalar_prefetch=0,
            grid=grid,
            in_specs=[
                pl.BlockSpec((tile_n, in_shape), lambda i: (i, 0)),     # x streamed
                pl.BlockSpec((in_shape, DIM_H_PAD), lambda i: (0, 0)),  # w1 resident
                pl.BlockSpec((1, DIM_H_PAD), lambda i: (0, 0)),         # b1 resident
                w2_spec,                                                # w2 resident
                pl.BlockSpec((1, out_shape), lambda i: (0, 0)),         # b2 resident
            ],
            out_specs=pl.BlockSpec((tile_n, out_shape), lambda i: (i, 0)),
        ),
        compiler_params=pltpu.CompilerParams(
            dimension_semantics=("parallel",),   # batch tiles -> both TCs (v7x)
            vmem_limit_bytes=vmem_bytes,
        ),
        cost_estimate=pl.CostEstimate(
            flops=flops, transcendentals=0, bytes_accessed=bytes_accessed),
    )(xp, w1p, b1pp, w2p, b2p)

    # drop batch padding, then torch.squeeze semantics (remove ALL size-1 dims)
    return jnp.squeeze(out[:n])


def init_params(key, in_shape, dim_h, out_shape):
    """Deterministic init mimicking nn.Linear default (uniform +/- 1/sqrt(fan_in))."""
    k1, k2, k3, k4 = jax.random.split(key, 4)
    bound1 = 1.0 / jnp.sqrt(in_shape)
    bound2 = 1.0 / jnp.sqrt(dim_h)
    w1 = jax.random.uniform(k1, (in_shape, dim_h), jnp.float32, -bound1, bound1)
    b1 = jax.random.uniform(k2, (1, dim_h), jnp.float32, -bound1, bound1)
    w2 = jax.random.uniform(k3, (dim_h, out_shape), jnp.float32, -bound2, bound2)
    b2 = jax.random.uniform(k4, (1, out_shape), jnp.float32, -bound2, bound2)
    return w1, b1, w2, b2


if __name__ == "__main__":
    N, IN_SHAPE, DIM_H, OUT_SHAPE = 8, 4, 64, 1

    key = jax.random.PRNGKey(0)
    kx, kp = jax.random.split(key)
    x = jax.random.normal(kx, (N, IN_SHAPE), jnp.float32)
    w1, b1, w2, b2 = init_params(kp, IN_SHAPE, DIM_H, OUT_SHAPE)

    y = deep_class_model_forward(x, w1, b1, w2, b2)
    y = jax.block_until_ready(y)

    # reference check in plain JAX (f32)
    h_ref = jnp.maximum(x @ w1 + b1, 0.0)
    y_ref = jnp.squeeze(h_ref @ w2 + b2)
    assert y.shape == y_ref.shape == (N,), (y.shape, y_ref.shape)
    # layer 1 uses bf16 MXU operands -> looser tolerance than pure f32
    assert jnp.allclose(y, y_ref, atol=2e-2, rtol=2e-2), float(
        jnp.max(jnp.abs(y - y_ref)))

    print("KERNEL_OK")
</pallas_src>

<mosaic_0001>
module attributes {stable_mosaic.version = 11 : i64} {
  func.func @kernel(%arg0: i32, %arg1: memref<8x4xf32, #tpu.memory_space<vmem>>, %arg2: memref<4x128xbf16, #tpu.memory_space<vmem>>, %arg3: memref<1x128xf32, #tpu.memory_space<vmem>>, %arg4: memref<1x128xf32, #tpu.memory_space<vmem>>, %arg5: memref<1x1xf32, #tpu.memory_space<vmem>>, %arg6: memref<8x1xf32, #tpu.memory_space<vmem>>) attributes {dimension_semantics = [#tpu.dimension_semantics<parallel>], iteration_bounds = array<i64: 1>, scalar_prefetch = 0 : i64, scratch_operands = 0 : i64, tpu.core_type = #tpu.core_type<tc>, window_params = [{transform_indices = @transform_0, window_bounds = array<i64: 8, 4>}, {pipeline_mode = #tpu.pipeline_mode<synchronous>, transform_indices = @transform_1, window_bounds = array<i64: 4, 128>}, {pipeline_mode = #tpu.pipeline_mode<synchronous>, transform_indices = @transform_2, window_bounds = array<i64: 1, 128>}, {pipeline_mode = #tpu.pipeline_mode<synchronous>, transform_indices = @transform_3, window_bounds = array<i64: 1, 128>}, {pipeline_mode = #tpu.pipeline_mode<synchronous>, transform_indices = @transform_4, window_bounds = array<i64: 1, 1>}, {transform_indices = @transform_5, window_bounds = array<i64: 8, 1>}]} {
    %c0 = arith.constant 0 : index
    %c0_0 = arith.constant 0 : index
    %0 = vector.load %arg1[%c0, %c0_0] : memref<8x4xf32, #tpu.memory_space<vmem>>, vector<8x4xf32>
    %1 = arith.truncf %0 : vector<8x4xf32> to vector<8x4xbf16>
    %c0_1 = arith.constant 0 : index
    %c0_2 = arith.constant 0 : index
    %2 = vector.load %arg2[%c0_1, %c0_2] : memref<4x128xbf16, #tpu.memory_space<vmem>>, vector<4x128xbf16>
    %cst = arith.constant dense<0.000000e+00> : vector<8x128xf32>
    %3 = tpu.matmul %1, %2, %cst {dimension_numbers = #tpu.dot_dimension_numbers<[1], [0], [0], [1], [0, 0, 1, 1], [], []>} : vector<8x4xbf16>, vector<4x128xbf16>, vector<8x128xf32> -> vector<8x128xf32>
    %c0_3 = arith.constant 0 : index
    %c0_4 = arith.constant 0 : index
    %4 = vector.load %arg3[%c0_3, %c0_4] : memref<1x128xf32, #tpu.memory_space<vmem>>, vector<1x128xf32>
    %5 = vector.broadcast %4 : vector<1x128xf32> to vector<8x128xf32>
    %6 = arith.addf %3, %5 : vector<8x128xf32>
    %cst_5 = arith.constant 0.000000e+00 : f32
    %7 = vector.broadcast %cst_5 : f32 to vector<8x128xf32>
    %8 = arith.maximumf %6, %7 : vector<8x128xf32>
    %c0_6 = arith.constant 0 : index
    %c0_7 = arith.constant 0 : index
    %9 = vector.load %arg4[%c0_6, %c0_7] : memref<1x128xf32, #tpu.memory_space<vmem>>, vector<1x128xf32>
    %10 = vector.broadcast %9 : vector<1x128xf32> to vector<8x128xf32>
    %11 = arith.mulf %8, %10 : vector<8x128xf32>
    %cst_8 = arith.constant dense<0.000000e+00> : vector<8xf32>
    %12 = vector.multi_reduction <add>, %11, %cst_8 [1] : vector<8x128xf32> to vector<8xf32>
    %13 = vector.shape_cast %12 : vector<8xf32> to vector<8x1xf32>
    %c0_9 = arith.constant 0 : index
    %c0_10 = arith.constant 0 : index
    %14 = vector.load %arg5[%c0_9, %c0_10] : memref<1x1xf32, #tpu.memory_space<vmem>>, vector<1x1xf32>
    %15 = vector.broadcast %14 : vector<1x1xf32> to vector<8x1xf32>
    %16 = arith.addf %13, %15 : vector<8x1xf32>
    %c0_11 = arith.constant 0 : index
    %c0_12 = arith.constant 0 : index
    %17 = vector.load %arg6[%c0_11, %c0_12] : memref<8x1xf32, #tpu.memory_space<vmem>>, vector<8x1xf32>
    tpu.vector_store %arg6[%c0_11, %c0_12], %16 {strides = array<i32>} : memref<8x1xf32, #tpu.memory_space<vmem>>, vector<8x1xf32>,
    return
  }
  func.func @transform_0(%arg0: i32) -> (i32, i32) {
    %c0_i32 = arith.constant 0 : i32
    %c0_i32_0 = arith.constant 0 : i32
    return %arg0, %c0_i32 : i32, i32
  }
  func.func @transform_1(%arg0: i32) -> (i32, i32) {
    %c0_i32 = arith.constant 0 : i32
    %c0_i32_0 = arith.constant 0 : i32
    %c0_i32_1 = arith.constant 0 : i32
    return %c0_i32, %c0_i32_0 : i32, i32
  }
  func.func @transform_2(%arg0: i32) -> (i32, i32) {
    %c0_i32 = arith.constant 0 : i32
    %c0_i32_0 = arith.constant 0 : i32
    %c0_i32_1 = arith.constant 0 : i32
    return %c0_i32, %c0_i32_0 : i32, i32
  }
  func.func @transform_3(%arg0: i32) -> (i32, i32) {
    %c0_i32 = arith.constant 0 : i32
    %c0_i32_0 = arith.constant 0 : i32
    %c0_i32_1 = arith.constant 0 : i32
    return %c0_i32, %c0_i32_0 : i32, i32
  }
  func.func @transform_4(%arg0: i32) -> (i32, i32) {
    %c0_i32 = arith.constant 0 : i32
    %c0_i32_0 = arith.constant 0 : i32
    %c0_i32_1 = arith.constant 0 : i32
    return %c0_i32, %c0_i32_0 : i32, i32
  }
  func.func @transform_5(%arg0: i32) -> (i32, i32) {
    %c0_i32 = arith.constant 0 : i32
    %c0_i32_0 = arith.constant 0 : i32
    return %arg0, %c0_i32 : i32, i32
  }
}

</mosaic_0001>

<llo_original>
// kernel: tpu_custom_call.1
$region0: #{tpu_custom_call.1}
  #allocation0 [shape = 'u32[]', space=smem, size = 0x4, offset = 0x4, fixed_abs, tag = 'smem constant byte address 0x4 - core index']
  #allocation1 [shape = 'u32[144,128]{1,0:T(1,128)}', space=vmem, size = 0x12000, scoped, tag = 'internal scratch']
  #allocation2 [shape = 'f32[1,1]{1,0:T(1,128)S(1)}', space=vmem, size = 0x200, scoped, tag = 'scoped memory for tpu_custom_call.1']
  %s0 = inlined_call_operand.vmem [shape: f32[8,4], index: 0, kind: input, shape index: {}]
  %s1 = inlined_call_operand.vmem [shape: bf16[4,128], index: 1, kind: input, shape index: {}]
  %s2 = inlined_call_operand.vmem [shape: f32[1,128], index: 2, kind: input, shape index: {}]
  %s3 = inlined_call_operand.vmem [shape: f32[1,128], index: 3, kind: input, shape index: {}]
  %s4 = inlined_call_operand.<no memory space> [shape: f32[1,1], index: 4, kind: input, shape index: {}]
  %s5 = inlined_call_operand.vmem [shape: f32[8,1], index: 5, kind: output, shape index: {}]
  %s6 = sld [smem:[#allocation0]]
  $region30: #{tpu_custom_call.1} parent=0
    _
  %s8 = ssub.s32 1, %s6
  %s9 = scalar_select 0, %s8, %s6
  %v10 = vstv %s4
  %11 = vst [vmem:[#allocation2] sm:$0x1] %v10
  // Predicated region
  $region2: #{tpu_custom_call.1} parent=0 // pred_check
    _
  $region3: #{tpu_custom_call.1} parent=0 // pred_check_branch
    %13 = sbr.rel (0) target = $region5
  $region4: #{tpu_custom_call.1} parent=0 // pred_region
    _
  $region5: #{tpu_custom_call.1} parent=0 // pred_fallthru
    _
  // Predicated region
  $region6: #{tpu_custom_call.1} parent=0 // pred_check
    _
  $region7: #{tpu_custom_call.1} parent=0 // pred_check_branch
    %15 = sbr.rel (0) target = $region9
  $region8: #{tpu_custom_call.1} parent=0 // pred_region
    _
  $region9: #{tpu_custom_call.1} parent=0 // pred_fallthru
    _
  // Predicated region
  $region10: #{tpu_custom_call.1} parent=0 // pred_check
    _
  $region11: #{tpu_custom_call.1} parent=0 // pred_check_branch
    %17 = sbr.rel (0) target = $region13
  $region12: #{tpu_custom_call.1} parent=0 // pred_region
    _
  $region13: #{tpu_custom_call.1} parent=0 // pred_fallthru
    _
  // Predicated region
  $region14: #{tpu_custom_call.1} parent=0 // pred_check
    _
  $region15: #{tpu_custom_call.1} parent=0 // pred_check_branch
    %19 = sbr.rel (0) target = $region17
  $region16: #{tpu_custom_call.1} parent=0 // pred_region
    _
  $region17: #{tpu_custom_call.1} parent=0 // pred_fallthru
    _
  // Predicated region
  $region18: #{tpu_custom_call.1} parent=0 // pred_check
    _
  $region19: #{tpu_custom_call.1} parent=0 // pred_check_branch
    %21 = sbr.rel (0) target = $region21
  $region20: #{tpu_custom_call.1} parent=0 // pred_region
    _
  $region21: #{tpu_custom_call.1} parent=0 // pred_fallthru
    _
  %v23 = vld [vmem:[%s0] sm:$0xff]
  %v24 = vpack.c.bf16 %v23, %v23
  %v25 = vld [vmem:[%s1] sm:$0x3]
  %v26 = vld [vmem:[%s2] sm:$0x1]
  %v28 = vlaneseq
  %v29 = vshrl.u32 %v28, 7
  %v30 = vsub.s32 0, %v29
  %v31 = vrot.slane %v26, %v30
  %vm33 = vcmask 31744
  %v35 = vsel %vm33, %v24, 0
  %vm37 = vcmask 1041408
  %v39 = vsel %vm37, %v25, 0
  %41 = vmatprep.subr.bf16.mxu0 0
  %42 = vmatpush1.bf16.msra.mxu0 %v39
  %43 = vmatprep.subr.bf16.mxu0 0
  %44 = vmatpush1.bf16.msra.mxu0 0
  %45 = vmatprep.subr.bf16.mxu0 0
  %46 = vmatpush1.bf16.msra.mxu0 0
  %47 = vmatprep.subr.bf16.mxu0 0
  %48 = vmatpush1.bf16.msra.mxu0 0
  %49 = vmatprep.subr.bf16.mxu0 0
  %50 = vmatpush1.bf16.msra.mxu0 0
  %51 = vmatprep.subr.bf16.mxu0 0
  %52 = vmatpush1.bf16.msra.mxu0 0
  %53 = vmatprep.subr.bf16.mxu0 0
  %54 = vmatpush1.bf16.msra.mxu0 0
  %55 = vmatprep.subr.bf16.mxu0 0
  %56 = vmatpush1.bf16.msra.mxu0 0
  %57 = vmatprep.subr.bf16.mxu0 0
  %58 = vmatpush1.bf16.msra.mxu0 0
  %59 = vmatprep.subr.bf16.mxu0 0
  %60 = vmatpush1.bf16.msra.mxu0 0
  %61 = vmatprep.subr.bf16.mxu0 0
  %62 = vmatpush1.bf16.msra.mxu0 0
  %63 = vmatprep.subr.bf16.mxu0 0
  %64 = vmatpush1.bf16.msra.mxu0 0
  %65 = vmatprep.subr.bf16.mxu0 0
  %66 = vmatpush1.bf16.msra.mxu0 0
  %67 = vmatprep.subr.bf16.mxu0 0
  %68 = vmatpush1.bf16.msra.mxu0 0
  %69 = vmatprep.subr.bf16.mxu0 0
  %70 = vmatpush1.bf16.msra.mxu0 0
  %71 = vmatprep.subr.bf16.mxu0 0
  %72 = vmatpush1.bf16.msra.mxu0 0
  %73 = vmatprep.mubr.bf16.mxu0 0
  %74 = vmatmul.mubr.bf16.gmra.mrb[0].mxu0 %v35
  %v75 = vpop.f32.mrb[0].mxu0
  %v76 = vadd.f32 %v31, %v75
  %v77 = vpop.f32.mrb[0].mxu0
  %v78 = vpop.f32.mrb[0].mxu0
  %v79 = vpop.f32.mrb[0].mxu0
  %80 = vdwg.mxu0
  %v81 = vmax.f32 %v76, 0.0
  %v82 = vld [vmem:[%s3] sm:$0x1]
  %v84 = vlaneseq
  %v85 = vshrl.u32 %v84, 7
  %v86 = vsub.s32 0, %v85
  %v87 = vrot.slane %v82, %v86
  %v89 = vmul.f32 %v81, %v87
  %90 = vadd.xlane.f32.xlu0 %v89
  %v91 = vpop.xlane.xlu0 %90
  %v92 = vld [vmem:[#allocation2] sm:$0x1]
  %v94 = vlaneseq
  %v95 = vshrl.u32 %v94, 7
  %v96 = vsub.s32 0, %v95
  %v97 = vrot.slane %v92, %v96
  %v99 = vadd.f32 %v91, %v97
  %vm100 = vcmask 7168
  %101 = vst.msk [vmem:[%s5] sm:$0xff] %vm100, %v99
  // Predicated region
  $region22: #{tpu_custom_call.1} parent=0 // pred_check
    _
  $region23: #{tpu_custom_call.1} parent=0 // pred_check_branch
    %103 = sbr.rel (0) target = $region25
  $region24: #{tpu_custom_call.1} parent=0 // pred_region
    _
  $region25: #{tpu_custom_call.1} parent=0 // pred_fallthru
    _
  // Predicated region
  $region26: #{tpu_custom_call.1} parent=0 // pred_check
    _
  $region27: #{tpu_custom_call.1} parent=0 // pred_check_branch
    %105 = sbr.rel (0) target = $region29
  $region28: #{tpu_custom_call.1} parent=0 // pred_region
    _
  $region29: #{tpu_custom_call.1} parent=0 // pred_fallthru
    _

</llo_original>
